<compile_context>
chip_gen: v7x
topology: tpu7x:2x2x1
jax: 0.10.0
libtpu: 0.0.40
codegen_flags: <defaults>
</compile_context>

<pallas_src>
import functools

import jax
import jax.numpy as jnp
from jax.experimental import pallas as pl
from jax.experimental.pallas import tpu as pltpu


# 48 MiB: <= v7x physical VMEM (64 MiB) with headroom; above the default
# scoped limits on v5e (16 MiB) and v6e (32 MiB), both of which have 128 MiB
# physical.  Passed as vmem_limit_bytes and used to cap tile_b.
_VMEM_BUDGET_BYTES = 48 * 1024 * 1024


def _pick_tile_b(B, D_in, D_hid):
    """Largest batch tile (multiple of 8, <=512) whose double-buffered inputs
    plus the resident bf16 W fit the per-generation VMEM budget."""
    if B <= 512:
        return B
    w_bytes = D_in * D_hid * 2                      # resident bf16 W
    per_row = (2 * 2 * D_in * 4                     # double-buffered f32 g + h tiles
               + 6 * D_hid * 4                      # gx / hx / prod f32 temporaries (+slack)
               + 6 * 4)                             # lb / ub / pred slivers
    avail = _VMEM_BUDGET_BYTES - w_bytes - (2 << 20)  # misc headroom
    # TODO(synk): when W alone approaches the budget (huge D_in*D_hid), add a
    # D_hid grid axis instead of shrinking tile_b further.
    cap = max(8, (avail // per_row) // 8 * 8)
    return max(8, min(512, cap) // 8 * 8)


# ---------------------------------------------------------------------------
# Fused kernel: Siamese forward (shared-weight embed + dot-product score) and
# the relu^2 interval loss, one batch tile per grid step.
# Grid: (batch_group [parallel], batch_tile_within_group [arbitrary]).
# ---------------------------------------------------------------------------
def siamese_fused_kernel(g_ref, h_ref, w_ref, b_ref, lb_ref, ub_ref,
                         pred_ref, loss_ref, *, inv_total):
    i = pl.program_id(1)                  # tile index within this batch group

    w = w_ref[...]                        # (D_in, D_hid) bf16, VMEM-resident
    bias = b_ref[...]                     # (1, D_hid) f32

    # Shared-weight ("Siamese") embedding.  Operands cast to bf16 at the MXU
    # input (in-kernel, so HBM only ever sees the original f32 tensors once),
    # f32 accumulation; post-matmul math stays f32 (v5e has no bf16 VPU).
    gx = jnp.dot(g_ref[...].astype(jnp.bfloat16), w,
                 preferred_element_type=jnp.float32) + bias     # (TB, D_hid)
    hx = jnp.dot(h_ref[...].astype(jnp.bfloat16), w,
                 preferred_element_type=jnp.float32) + bias     # (TB, D_hid)

    # TODO(synk): forward_emb is abstract in the PyTorch base class; a
    # dot-product similarity head is used as the concrete scoring function.
    score = jnp.sum(gx * hx, axis=-1, keepdims=True)            # (TB, 1) f32
    pred_ref[...] = score

    # compute_loss fused: mean(relu(lb - pred)^2 + relu(pred - ub)^2).
    lo = jnp.maximum(lb_ref[...] - score, 0.0)
    hi = jnp.maximum(score - ub_ref[...], 0.0)
    tile_sum = jnp.sum(lo * lo + hi * hi, keepdims=True) * inv_total  # (1, 1)

    # Accumulate straight into the revisited per-group loss block (resident in
    # VMEM across the inner "arbitrary" axis); no scratch accumulator needed.
    @pl.when(i == 0)
    def _():
        loss_ref[...] = jnp.zeros_like(loss_ref)

    loss_ref[...] += tile_sum


def siamese_forward_and_loss(g, h, w, b, lb, ub, *, tile_b=None):
    """g, h: [B, D_in] f32; w: [D_in, D_hid] f32; b: [D_hid] f32; lb, ub: [B].

    Returns (pred [B] f32, loss scalar f32), computed in one fused kernel.
    """
    B, D_in = g.shape
    D_hid = w.shape[1]

    if tile_b is None:
        tile_b = _pick_tile_b(B, D_in, D_hid)
    # TODO(synk): pad ragged batches (neutral lb=+inf-style bounds + masked
    # mean) instead of asserting.
    assert B % tile_b == 0, "batch must divide into whole tiles"
    nb_total = B // tile_b
    assert nb_total == 1 or tile_b % 8 == 0, "tile_b must be sublane-aligned"

    # Batch groups for the leading "parallel" axis: lets v7x's two TensorCores
    # each own half the tiles (with their own partial-loss block, so there is
    # no cross-core accumulation race).  Harmless on single-TC v5e/v6e.
    n_groups = 2 if (nb_total >= 2 and nb_total % 2 == 0) else 1
    nb_per_group = nb_total // n_groups

    # W cast to bf16 once in the wrapper (tiny, and reusable across calls);
    # bias / loss bounds stay f32.  g / h are passed through untouched.
    w_bf = w.astype(jnp.bfloat16)
    b2 = b.reshape(1, D_hid).astype(jnp.float32)
    lb2 = lb.reshape(B, 1).astype(jnp.float32)
    ub2 = ub.reshape(B, 1).astype(jnp.float32)

    kernel = functools.partial(siamese_fused_kernel, inv_total=1.0 / B)

    batch_idx = lambda gi, i: (gi * nb_per_group + i, 0)

    pred, loss_parts = pl.pallas_call(
        kernel,
        out_shape=(
            jax.ShapeDtypeStruct((B, 1), jnp.float32),          # per-pair score
            jax.ShapeDtypeStruct((n_groups, 1), jnp.float32),   # per-group loss
        ),
        grid_spec=pltpu.PrefetchScalarGridSpec(
            num_scalar_prefetch=0,
            grid=(n_groups, nb_per_group),
            in_specs=[
                # g / h tiles: read once from HBM as f32, cast in-kernel.
                pl.BlockSpec((tile_b, D_in), batch_idx),
                pl.BlockSpec((tile_b, D_in), batch_idx),
                # W / b: constant index_map -> VMEM-resident across all tiles.
                pl.BlockSpec((D_in, D_hid), lambda gi, i: (0, 0)),
                pl.BlockSpec((1, D_hid), lambda gi, i: (0, 0)),
                pl.BlockSpec((tile_b, 1), batch_idx),
                pl.BlockSpec((tile_b, 1), batch_idx),
            ],
            out_specs=[
                pl.BlockSpec((tile_b, 1), batch_idx),
                # Revisited accumulator block per batch group.
                pl.BlockSpec((1, 1), lambda gi, i: (gi, 0)),
            ],
        ),
        # Inner (loss-accumulating) axis must stay "arbitrary"; the group axis
        # is "parallel" for megacore sharding.  vmem_limit_bytes is set
        # explicitly per the v5e/v7x sizing feedback.
        compiler_params=pltpu.CompilerParams(
            dimension_semantics=("parallel", "arbitrary"),
            vmem_limit_bytes=_VMEM_BUDGET_BYTES),
    )(g, h, w_bf, b2, lb2, ub2)

    return pred[:, 0], jnp.sum(loss_parts)


# ---------------------------------------------------------------------------
# Pure-JAX references for verification
# ---------------------------------------------------------------------------
def ref_forward_loss(g, h, w, b, lb, ub, *, cast_bf16):
    if cast_bf16:
        g = g.astype(jnp.bfloat16)
        h = h.astype(jnp.bfloat16)
        w = w.astype(jnp.bfloat16)
    gx = jnp.dot(g, w, preferred_element_type=jnp.float32) + b
    hx = jnp.dot(h, w, preferred_element_type=jnp.float32) + b
    pred = jnp.sum(gx * hx, axis=-1)
    loss = jnp.mean(jnp.maximum(lb - pred, 0.0) ** 2
                    + jnp.maximum(pred - ub, 0.0) ** 2)
    return pred, loss


if __name__ == "__main__":
    B, D_in, D_hid = 8, 128, 128

    key = jax.random.PRNGKey(0)
    kg, kh, kw, kb, klb, kub = jax.random.split(key, 6)

    g = jax.random.normal(kg, (B, D_in), dtype=jnp.float32)
    h = jax.random.normal(kh, (B, D_in), dtype=jnp.float32)

    # Deterministic "embed_model" parameters (shared / Siamese).
    w = jax.random.normal(kw, (D_in, D_hid), dtype=jnp.float32) * 0.05
    b = jax.random.normal(kb, (D_hid,), dtype=jnp.float32) * 0.05

    lb = jax.random.normal(klb, (B,), dtype=jnp.float32)
    ub = lb + jnp.abs(jax.random.normal(kub, (B,), dtype=jnp.float32))

    pred, loss = siamese_forward_and_loss(g, h, w, b, lb, ub)
    jax.block_until_ready((pred, loss))

    # Apples-to-apples check against a bf16-matmul / f32-accumulate reference.
    pred_bf, loss_bf = ref_forward_loss(g, h, w, b, lb, ub, cast_bf16=True)
    assert jnp.allclose(pred, pred_bf, rtol=2e-3, atol=2e-3)
    assert jnp.allclose(loss, loss_bf, rtol=2e-3, atol=2e-3)

    # Sanity check against the full-f32 reference (loose tolerance for the
    # bf16 operand cast).
    pred_f32, loss_f32 = ref_forward_loss(g, h, w, b, lb, ub, cast_bf16=False)
    assert jnp.allclose(pred, pred_f32, rtol=5e-2, atol=0.5)
    assert jnp.allclose(loss, loss_f32, rtol=1e-1, atol=1.0)

    print("KERNEL_OK")
</pallas_src>

<mosaic_0001>
module attributes {stable_mosaic.version = 11 : i64} {
  func.func @siamese_fused_kernel(%arg0: i32, %arg1: i32, %arg2: memref<8x128xf32, #tpu.memory_space<vmem>>, %arg3: memref<8x128xf32, #tpu.memory_space<vmem>>, %arg4: memref<128x128xbf16, #tpu.memory_space<vmem>>, %arg5: memref<1x128xf32, #tpu.memory_space<vmem>>, %arg6: memref<8x1xf32, #tpu.memory_space<vmem>>, %arg7: memref<8x1xf32, #tpu.memory_space<vmem>>, %arg8: memref<8x1xf32, #tpu.memory_space<vmem>>, %arg9: memref<1x1xf32, #tpu.memory_space<vmem>>) attributes {dimension_semantics = [#tpu.dimension_semantics<parallel>, #tpu.dimension_semantics<arbitrary>], iteration_bounds = array<i64: 1, 1>, scalar_prefetch = 0 : i64, scratch_operands = 0 : i64, tpu.core_type = #tpu.core_type<tc>, window_params = [{transform_indices = @transform_0, window_bounds = array<i64: 8, 128>}, {transform_indices = @transform_1, window_bounds = array<i64: 8, 128>}, {pipeline_mode = #tpu.pipeline_mode<synchronous>, transform_indices = @transform_2, window_bounds = array<i64: 128, 128>}, {pipeline_mode = #tpu.pipeline_mode<synchronous>, transform_indices = @transform_3, window_bounds = array<i64: 1, 128>}, {transform_indices = @transform_4, window_bounds = array<i64: 8, 1>}, {transform_indices = @transform_5, window_bounds = array<i64: 8, 1>}, {transform_indices = @transform_6, window_bounds = array<i64: 8, 1>}, {transform_indices = @transform_7, window_bounds = array<i64: 1, 1>}]} {
    %c0 = arith.constant 0 : index
    %c0_0 = arith.constant 0 : index
    %0 = vector.load %arg4[%c0, %c0_0] : memref<128x128xbf16, #tpu.memory_space<vmem>>, vector<128x128xbf16>
    %c0_1 = arith.constant 0 : index
    %c0_2 = arith.constant 0 : index
    %1 = vector.load %arg5[%c0_1, %c0_2] : memref<1x128xf32, #tpu.memory_space<vmem>>, vector<1x128xf32>
    %c0_3 = arith.constant 0 : index
    %c0_4 = arith.constant 0 : index
    %2 = vector.load %arg2[%c0_3, %c0_4] : memref<8x128xf32, #tpu.memory_space<vmem>>, vector<8x128xf32>
    %3 = arith.truncf %2 : vector<8x128xf32> to vector<8x128xbf16>
    %cst = arith.constant dense<0.000000e+00> : vector<8x128xf32>
    %4 = tpu.matmul %3, %0, %cst {dimension_numbers = #tpu.dot_dimension_numbers<[1], [0], [0], [1], [0, 0, 1, 1], [], []>} : vector<8x128xbf16>, vector<128x128xbf16>, vector<8x128xf32> -> vector<8x128xf32>
    %5 = vector.broadcast %1 : vector<1x128xf32> to vector<8x128xf32>
    %6 = arith.addf %4, %5 : vector<8x128xf32>
    %c0_5 = arith.constant 0 : index
    %c0_6 = arith.constant 0 : index
    %7 = vector.load %arg3[%c0_5, %c0_6] : memref<8x128xf32, #tpu.memory_space<vmem>>, vector<8x128xf32>
    %8 = arith.truncf %7 : vector<8x128xf32> to vector<8x128xbf16>
    %cst_7 = arith.constant dense<0.000000e+00> : vector<8x128xf32>
    %9 = tpu.matmul %8, %0, %cst_7 {dimension_numbers = #tpu.dot_dimension_numbers<[1], [0], [0], [1], [0, 0, 1, 1], [], []>} : vector<8x128xbf16>, vector<128x128xbf16>, vector<8x128xf32> -> vector<8x128xf32>
    %10 = vector.broadcast %1 : vector<1x128xf32> to vector<8x128xf32>
    %11 = arith.addf %9, %10 : vector<8x128xf32>
    %12 = arith.mulf %6, %11 : vector<8x128xf32>
    %cst_8 = arith.constant dense<0.000000e+00> : vector<8xf32>
    %13 = vector.multi_reduction <add>, %12, %cst_8 [1] : vector<8x128xf32> to vector<8xf32>
    %14 = vector.shape_cast %13 : vector<8xf32> to vector<8x1xf32>
    %c0_9 = arith.constant 0 : index
    %c0_10 = arith.constant 0 : index
    %15 = vector.load %arg8[%c0_9, %c0_10] : memref<8x1xf32, #tpu.memory_space<vmem>>, vector<8x1xf32>
    tpu.vector_store %arg8[%c0_9, %c0_10], %14 {strides = array<i32>} : memref<8x1xf32, #tpu.memory_space<vmem>>, vector<8x1xf32>,
    %c0_11 = arith.constant 0 : index
    %c0_12 = arith.constant 0 : index
    %16 = vector.load %arg6[%c0_11, %c0_12] : memref<8x1xf32, #tpu.memory_space<vmem>>, vector<8x1xf32>
    %17 = arith.subf %16, %14 : vector<8x1xf32>
    %cst_13 = arith.constant 0.000000e+00 : f32
    %18 = vector.broadcast %cst_13 : f32 to vector<8x1xf32>
    %19 = arith.maximumf %17, %18 : vector<8x1xf32>
    %c0_14 = arith.constant 0 : index
    %c0_15 = arith.constant 0 : index
    %20 = vector.load %arg7[%c0_14, %c0_15] : memref<8x1xf32, #tpu.memory_space<vmem>>, vector<8x1xf32>
    %21 = arith.subf %14, %20 : vector<8x1xf32>
    %cst_16 = arith.constant 0.000000e+00 : f32
    %22 = vector.broadcast %cst_16 : f32 to vector<8x1xf32>
    %23 = arith.maximumf %21, %22 : vector<8x1xf32>
    %24 = arith.mulf %19, %19 : vector<8x1xf32>
    %25 = arith.mulf %23, %23 : vector<8x1xf32>
    %26 = arith.addf %24, %25 : vector<8x1xf32>
    %27 = vector.shape_cast %26 : vector<8x1xf32> to vector<1x8x1xf32>
    %cst_17 = arith.constant dense<0.000000e+00> : vector<1xf32>
    %28 = vector.multi_reduction <add>, %27, %cst_17 [1, 2] : vector<1x8x1xf32> to vector<1xf32>
    %29 = vector.shape_cast %28 : vector<1xf32> to vector<1x1x1xf32>
    %30 = vector.extract %29[0, 0, 0] : f32 from vector<1x1x1xf32>
    %31 = vector.broadcast %30 : f32 to vector<1x1xf32>
    %cst_18 = arith.constant 1.250000e-01 : f32
    %32 = vector.broadcast %cst_18 : f32 to vector<1x1xf32>
    %33 = arith.mulf %31, %32 : vector<1x1xf32>
    %c0_i32 = arith.constant 0 : i32
    %34 = arith.cmpi eq, %arg1, %c0_i32 : i32
    %35 = arith.extui %34 : i1 to i32
    %c0_i32_19 = arith.constant 0 : i32
    %36 = arith.cmpi ne, %35, %c0_i32_19 : i32
    scf.if %36 {
      %cst_24 = arith.constant 0.000000e+00 : f32
      %40 = vector.broadcast %cst_24 : f32 to vector<1x1xf32>
      %c0_25 = arith.constant 0 : index
      %c0_26 = arith.constant 0 : index
      %41 = vector.load %arg9[%c0_25, %c0_26] : memref<1x1xf32, #tpu.memory_space<vmem>>, vector<1x1xf32>
      tpu.vector_store %arg9[%c0_25, %c0_26], %40 {strides = array<i32>} : memref<1x1xf32, #tpu.memory_space<vmem>>, vector<1x1xf32>,
    } else {
    }
    %c0_20 = arith.constant 0 : index
    %c0_21 = arith.constant 0 : index
    %37 = vector.load %arg9[%c0_20, %c0_21] : memref<1x1xf32, #tpu.memory_space<vmem>>, vector<1x1xf32>
    %38 = arith.addf %37, %33 : vector<1x1xf32>
    %c0_22 = arith.constant 0 : index
    %c0_23 = arith.constant 0 : index
    %39 = vector.load %arg9[%c0_22, %c0_23] : memref<1x1xf32, #tpu.memory_space<vmem>>, vector<1x1xf32>
    tpu.vector_store %arg9[%c0_22, %c0_23], %38 {strides = array<i32>} : memref<1x1xf32, #tpu.memory_space<vmem>>, vector<1x1xf32>,
    return
  }
  func.func @transform_0(%arg0: i32, %arg1: i32) -> (i32, i32) {
    %c1_i32 = arith.constant 1 : i32
    %0 = arith.muli %arg0, %c1_i32 : i32
    %1 = arith.addi %0, %arg1 : i32
    %c0_i32 = arith.constant 0 : i32
    %c0_i32_0 = arith.constant 0 : i32
    return %1, %c0_i32 : i32, i32
  }
  func.func @transform_1(%arg0: i32, %arg1: i32) -> (i32, i32) {
    %c1_i32 = arith.constant 1 : i32
    %0 = arith.muli %arg0, %c1_i32 : i32
    %1 = arith.addi %0, %arg1 : i32
    %c0_i32 = arith.constant 0 : i32
    %c0_i32_0 = arith.constant 0 : i32
    return %1, %c0_i32 : i32, i32
  }
  func.func @transform_2(%arg0: i32, %arg1: i32) -> (i32, i32) {
    %c0_i32 = arith.constant 0 : i32
    %c0_i32_0 = arith.constant 0 : i32
    %c0_i32_1 = arith.constant 0 : i32
    return %c0_i32, %c0_i32_0 : i32, i32
  }
  func.func @transform_3(%arg0: i32, %arg1: i32) -> (i32, i32) {
    %c0_i32 = arith.constant 0 : i32
    %c0_i32_0 = arith.constant 0 : i32
    %c0_i32_1 = arith.constant 0 : i32
    return %c0_i32, %c0_i32_0 : i32, i32
  }
  func.func @transform_4(%arg0: i32, %arg1: i32) -> (i32, i32) {
    %c1_i32 = arith.constant 1 : i32
    %0 = arith.muli %arg0, %c1_i32 : i32
    %1 = arith.addi %0, %arg1 : i32
    %c0_i32 = arith.constant 0 : i32
    %c0_i32_0 = arith.constant 0 : i32
    return %1, %c0_i32 : i32, i32
  }
  func.func @transform_5(%arg0: i32, %arg1: i32) -> (i32, i32) {
    %c1_i32 = arith.constant 1 : i32
    %0 = arith.muli %arg0, %c1_i32 : i32
    %1 = arith.addi %0, %arg1 : i32
    %c0_i32 = arith.constant 0 : i32
    %c0_i32_0 = arith.constant 0 : i32
    return %1, %c0_i32 : i32, i32
  }
  func.func @transform_6(%arg0: i32, %arg1: i32) -> (i32, i32) {
    %c1_i32 = arith.constant 1 : i32
    %0 = arith.muli %arg0, %c1_i32 : i32
    %1 = arith.addi %0, %arg1 : i32
    %c0_i32 = arith.constant 0 : i32
    %c0_i32_0 = arith.constant 0 : i32
    return %1, %c0_i32 : i32, i32
  }
  func.func @transform_7(%arg0: i32, %arg1: i32) -> (i32, i32) {
    %c0_i32 = arith.constant 0 : i32
    %c0_i32_0 = arith.constant 0 : i32
    return %arg0, %c0_i32 : i32, i32
  }
}

</mosaic_0001>

<llo_original>
// kernel: tpu_custom_call.1
$region0: #{tpu_custom_call.1}
  #allocation0 [shape = 'u32[]', space=smem, size = 0x4, offset = 0x4, fixed_abs, tag = 'smem constant byte address 0x4 - core index']
  #allocation1 [shape = 'u32[144,128]{1,0:T(1,128)}', space=vmem, size = 0x12000, scoped, tag = 'internal scratch']
  %s0 = inlined_call_operand.vmem [shape: f32[8,128], index: 0, kind: input, shape index: {}]
  %s1 = inlined_call_operand.vmem [shape: f32[8,128], index: 1, kind: input, shape index: {}]
  %s2 = inlined_call_operand.hbm [shape: bf16[128,128], index: 2, kind: input, shape index: {}]
  %s3 = inlined_call_operand.vmem [shape: f32[1,128], index: 3, kind: input, shape index: {}]
  %s4 = inlined_call_operand.vmem [shape: f32[8,1], index: 4, kind: input, shape index: {}]
  %s5 = inlined_call_operand.vmem [shape: f32[8,1], index: 5, kind: input, shape index: {}]
  %s6 = inlined_call_operand.vmem [shape: f32[8,1], index: 6, kind: output, shape index: {0}]
  %s7 = inlined_call_operand.hbm [shape: f32[1,1], index: 7, kind: output, shape index: {1}]
  %8 = xla_tuple %s6, %s7
  %s9 = sld [smem:[#allocation0]]
  $region50: #{tpu_custom_call.1} parent=0
    _
  %s11 = ssub.s32 1, %s9
  %s12 = scalar_select 0, %s11, %s9
  $region1: #{tpu_custom_call.1} parent=0
    #allocation2 [shape = 'u8[32768]{0}', space=vmem, size = 0x8000, scoped, tag = 'input window, operand 2, single buffered']
    #allocation3 [shape = 's32[1]{0}', space=sflag, size = 0x4, scoped, tag = 'scoped memory for tpu_custom_call.1']
    #allocation4 [shape = 's32[1]{0}', space=sflag, size = 0x4, scoped, tag = 'scoped memory for tpu_custom_call.1']
    #allocation5 [shape = 'u8[512]{0}', space=vmem, size = 0x400, scoped, tag = 'output window, operand 1, single buffered']
    %13 = vsyncpa [#allocation3], 0
    %14 = vsyncpa [#allocation4], 0
    // Predicated region
    $region2: #{tpu_custom_call.1} parent=1 // pred_check
      _
    $region3: #{tpu_custom_call.1} parent=1 // pred_check_branch
      %16 = sbr.rel (0) target = $region5
    $region4: #{tpu_custom_call.1} parent=1 // pred_region
      %s17 = sadd.s32 0, 0
      %p18 = scmp.lt.s32.totalorder %s17, 0
      %s19 = scalar_select %p18, %s17, 0
      %s20 = smul.addr %s19, 8
      %s21 = scalar_lea.vmem %s0, %s20
      %s22 = sadd.s32 0, 0
    $region5: #{tpu_custom_call.1} parent=1 // pred_fallthru
      _
    // Predicated region
    $region6: #{tpu_custom_call.1} parent=1 // pred_check
      _
    $region7: #{tpu_custom_call.1} parent=1 // pred_check_branch
      %24 = sbr.rel (0) target = $region9
    $region8: #{tpu_custom_call.1} parent=1 // pred_region
      %s25 = sadd.s32 0, 0
      %p26 = scmp.lt.s32.totalorder %s25, 0
      %s27 = scalar_select %p26, %s25, 0
      %s28 = smul.addr %s27, 8
      %s29 = scalar_lea.vmem %s1, %s28
      %s30 = sadd.s32 0, 0
    $region9: #{tpu_custom_call.1} parent=1 // pred_fallthru
      _
    // Predicated region
    $region10: #{tpu_custom_call.1} parent=1 // pred_check
      _
    $region11: #{tpu_custom_call.1} parent=1 // pred_check_branch
      %32 = sbr.rel (0) target = $region13
    $region12: #{tpu_custom_call.1} parent=1 // pred_region
      %s34 = ssub.s32 1024, 1024
      %35 = vsyncadd [#allocation3], %s34
      %s36 = sshll.u32 [#allocation2], 4
      %s37 = int_to_ptr.vmem [resolvable:$true] %s36
      %42 = dma.hbm_to_vmem [thread:$0]  %s2, 1024, %s37, [#allocation3], 64, 64, 4
    $region13: #{tpu_custom_call.1} parent=1 // pred_fallthru
      _
    // Predicated region
    $region14: #{tpu_custom_call.1} parent=1 // pred_check
      _
    $region15: #{tpu_custom_call.1} parent=1 // pred_check_branch
      %44 = sbr.rel (0) target = $region17
    $region16: #{tpu_custom_call.1} parent=1 // pred_region
      _
    $region17: #{tpu_custom_call.1} parent=1 // pred_fallthru
      _
    // Predicated region
    $region18: #{tpu_custom_call.1} parent=1 // pred_check
      _
    $region19: #{tpu_custom_call.1} parent=1 // pred_check_branch
      %46 = sbr.rel (0) target = $region21
    $region20: #{tpu_custom_call.1} parent=1 // pred_region
      %s47 = sadd.s32 0, 0
      %p48 = scmp.lt.s32.totalorder %s47, 0
      %s49 = scalar_select %p48, %s47, 0
      %s50 = smul.addr %s49, 8
      %s51 = scalar_lea.vmem %s4, %s50
      %s52 = sadd.s32 0, 0
    $region21: #{tpu_custom_call.1} parent=1 // pred_fallthru
      _
    // Predicated region
    $region22: #{tpu_custom_call.1} parent=1 // pred_check
      _
    $region23: #{tpu_custom_call.1} parent=1 // pred_check_branch
      %54 = sbr.rel (0) target = $region25
    $region24: #{tpu_custom_call.1} parent=1 // pred_region
      %s55 = sadd.s32 0, 0
      %p56 = scmp.lt.s32.totalorder %s55, 0
      %s57 = scalar_select %p56, %s55, 0
      %s58 = smul.addr %s57, 8
      %s59 = scalar_lea.vmem %s5, %s58
      %s60 = sadd.s32 0, 0
    $region25: #{tpu_custom_call.1} parent=1 // pred_fallthru
      _
    // Predicated region
    $region26: #{tpu_custom_call.1} parent=1 // pred_check
      _
    $region27: #{tpu_custom_call.1} parent=1 // pred_check_branch
      %62 = sbr.rel (0) target = $region29
    $region28: #{tpu_custom_call.1} parent=1 // pred_region
      %63 = dma.done [#allocation3], 1024
    $region29: #{tpu_custom_call.1} parent=1 // pred_fallthru
      _
    %s64 = sadd.s32 0, 0
    %p65 = scmp.lt.s32.totalorder %s64, 0
    %s66 = scalar_select %p65, %s64, 0
    %s67 = smul.addr %s66, 8
    %s68 = scalar_lea.vmem %s0, %s67
    %s69 = sadd.s32 0, 0
    %p70 = scmp.lt.s32.totalorder %s69, 0
    %s71 = scalar_select %p70, %s69, 0
    %s72 = smul.addr %s71, 8
    %s73 = scalar_lea.vmem %s1, %s72
    %s74 = sadd.s32 0, 0
    %p75 = scmp.lt.s32.totalorder %s74, 0
    %s76 = scalar_select %p75, %s74, 0
    %s77 = smul.addr %s76, 8
    %s78 = scalar_lea.vmem %s4, %s77
    %s79 = sadd.s32 0, 0
    %p80 = scmp.lt.s32.totalorder %s79, 0
    %s81 = scalar_select %p80, %s79, 0
    %s82 = smul.addr %s81, 8
    %s83 = scalar_lea.vmem %s5, %s82
    %s84 = sadd.s32 0, 0
    %p85 = scmp.lt.s32.totalorder %s84, 0
    %s86 = scalar_select %p85, %s84, 0
    %s87 = smul.addr %s86, 8
    %s88 = scalar_lea.vmem %s6, %s87
    %s89 = sadd.s32 0, 0
    %p90 = scmp.lt.s32.totalorder %s89, 0
    %s91 = scalar_select %p90, %s89, 0
    %s92 = smul.addr %s91, 8
    %s93 = scalar_lea.vmem %s0, %s92
    %s94 = sadd.s32 0, 0
    %s95 = sadd.s32 0, 0
    %p96 = scmp.lt.s32.totalorder %s95, 0
    %s97 = scalar_select %p96, %s95, 0
    %s98 = smul.addr %s97, 8
    %s99 = scalar_lea.vmem %s1, %s98
    %s100 = sadd.s32 0, 0
    %s101 = sadd.s32 0, 0
    %p102 = scmp.lt.s32.totalorder %s101, 0
    %s103 = scalar_select %p102, %s101, 0
    %s104 = smul.addr %s103, 8
    %s105 = scalar_lea.vmem %s4, %s104
    %s106 = sadd.s32 0, 0
    %s107 = sadd.s32 0, 0
    %p108 = scmp.lt.s32.totalorder %s107, 0
    %s109 = scalar_select %p108, %s107, 0
    %s110 = smul.addr %s109, 8
    %s111 = scalar_lea.vmem %s5, %s110
    %s112 = sadd.s32 0, 0
    %s113 = sadd.s32 0, 0
    %p114 = scmp.lt.s32.totalorder %s113, 0
    %s115 = scalar_select %p114, %s113, 0
    %s116 = smul.addr %s115, 8
    %s117 = scalar_lea.vmem %s6, %s116
    %s118 = sadd.s32 0, 0
    %v120 = vld [vmem:[#allocation2] sm:$0xf]
    %v121 = vld [vmem:[#allocation2 + $0x4] sm:$0xf]
    %v122 = vld [vmem:[#allocation2 + $0x8] sm:$0xf]
    %v123 = vld [vmem:[#allocation2 + $0xc] sm:$0xf]
    %v124 = vld [vmem:[#allocation2 + $0x10] sm:$0xf]
    %v125 = vld [vmem:[#allocation2 + $0x14] sm:$0xf]
    %v126 = vld [vmem:[#allocation2 + $0x18] sm:$0xf]
    %v127 = vld [vmem:[#allocation2 + $0x1c] sm:$0xf]
    %v128 = vld [vmem:[#allocation2 + $0x20] sm:$0xf]
    %v129 = vld [vmem:[#allocation2 + $0x24] sm:$0xf]
    %v130 = vld [vmem:[#allocation2 + $0x28] sm:$0xf]
    %v131 = vld [vmem:[#allocation2 + $0x2c] sm:$0xf]
    %v132 = vld [vmem:[#allocation2 + $0x30] sm:$0xf]
    %v133 = vld [vmem:[#allocation2 + $0x34] sm:$0xf]
    %v134 = vld [vmem:[#allocation2 + $0x38] sm:$0xf]
    %v135 = vld [vmem:[#allocation2 + $0x3c] sm:$0xf]
    %v136 = vld [vmem:[%s3] sm:$0x1]
    %v137 = vld [vmem:[%s93] sm:$0xff]
    %v138 = vpack.c.bf16 %v137, %v137
    %v140 = vlaneseq
    %v141 = vshrl.u32 %v140, 7
    %v142 = vsub.s32 0, %v141
    %v143 = vrot.slane %v136, %v142
    %v161 = vunpack.c.l.b16 %v120
    %v162 = vunpack.c.l.b16 %v121
    %v163 = vunpack.c.l.b16 %v122
    %v164 = vunpack.c.l.b16 %v123
    %v165 = vunpack.c.l.b16 %v124
    %v166 = vunpack.c.l.b16 %v125
    %v167 = vunpack.c.l.b16 %v126
    %v168 = vunpack.c.l.b16 %v127
    %v169 = vunpack.c.l.b16 %v128
    %v170 = vunpack.c.l.b16 %v129
    %v171 = vunpack.c.l.b16 %v130
    %v172 = vunpack.c.l.b16 %v131
    %v173 = vunpack.c.l.b16 %v132
    %v174 = vunpack.c.l.b16 %v133
    %v175 = vunpack.c.l.b16 %v134
    %v176 = vunpack.c.l.b16 %v135
    %v177 = vpack.c.b16 %v162, %v161
    %v178 = vpack.c.b16 %v164, %v163
    %v179 = vpack.c.b16 %v166, %v165
    %v180 = vpack.c.b16 %v168, %v167
    %v181 = vpack.c.b16 %v170, %v169
    %v182 = vpack.c.b16 %v172, %v171
    %v183 = vpack.c.b16 %v174, %v173
    %v184 = vpack.c.b16 %v176, %v175
    %193 = vmatprep.subr.bf16.mxu0 0
    %194 = vmatpush1.bf16.msra.mxu0 %v177
    %195 = vmatprep.subr.bf16.mxu0 0
    %196 = vmatpush1.bf16.msra.mxu0 %v178
    %197 = vmatprep.subr.bf16.mxu0 0
    %198 = vmatpush1.bf16.msra.mxu0 %v179
    %199 = vmatprep.subr.bf16.mxu0 0
    %200 = vmatpush1.bf16.msra.mxu0 %v180
    %201 = vmatprep.subr.bf16.mxu0 0
    %202 = vmatpush1.bf16.msra.mxu0 %v181
    %203 = vmatprep.subr.bf16.mxu0 0
    %204 = vmatpush1.bf16.msra.mxu0 %v182
    %205 = vmatprep.subr.bf16.mxu0 0
    %206 = vmatpush1.bf16.msra.mxu0 %v183
    %207 = vmatprep.subr.bf16.mxu0 0
    %208 = vmatpush1.bf16.msra.mxu0 %v184
    %209 = vmatprep.subr.bf16.mxu0 0
    %210 = vmatpush1.bf16.msra.mxu0 0
    %211 = vmatprep.subr.bf16.mxu0 0
    %212 = vmatpush1.bf16.msra.mxu0 0
    %213 = vmatprep.subr.bf16.mxu0 0
    %214 = vmatpush1.bf16.msra.mxu0 0
    %215 = vmatprep.subr.bf16.mxu0 0
    %216 = vmatpush1.bf16.msra.mxu0 0
    %217 = vmatprep.subr.bf16.mxu0 0
    %218 = vmatpush1.bf16.msra.mxu0 0
    %219 = vmatprep.subr.bf16.mxu0 0
    %220 = vmatpush1.bf16.msra.mxu0 0
    %221 = vmatprep.subr.bf16.mxu0 0
    %222 = vmatpush1.bf16.msra.mxu0 0
    %223 = vmatprep.subr.bf16.mxu0 0
    %224 = vmatpush1.bf16.msra.mxu0 0
    %225 = vmatprep.mubr.bf16.mxu0 0
    %226 = vmatmul.mubr.bf16.gmra.mrb[0].mxu0 %v138
    %v227 = vpop.f32.mrb[0].mxu0
    %v228 = vadd.f32 %v143, %v227
    %v229 = vpop.f32.mrb[0].mxu0
    %v230 = vpop.f32.mrb[0].mxu0
    %v231 = vpop.f32.mrb[0].mxu0
    %232 = vdwg.mxu0
    %v233 = vld [vmem:[%s99] sm:$0xff]
    %v234 = vpack.c.bf16 %v233, %v233
    %235 = vmatprep.subr.bf16.mxu0 0
    %236 = vmatpush1.bf16.msra.mxu0 %v177
    %237 = vmatprep.subr.bf16.mxu0 0
    %238 = vmatpush1.bf16.msra.mxu0 %v178
    %239 = vmatprep.subr.bf16.mxu0 0
    %240 = vmatpush1.bf16.msra.mxu0 %v179
    %241 = vmatprep.subr.bf16.mxu0 0
    %242 = vmatpush1.bf16.msra.mxu0 %v180
    %243 = vmatprep.subr.bf16.mxu0 0
    %244 = vmatpush1.bf16.msra.mxu0 %v181
    %245 = vmatprep.subr.bf16.mxu0 0
    %246 = vmatpush1.bf16.msra.mxu0 %v182
    %247 = vmatprep.subr.bf16.mxu0 0
    %248 = vmatpush1.bf16.msra.mxu0 %v183
    %249 = vmatprep.subr.bf16.mxu0 0
    %250 = vmatpush1.bf16.msra.mxu0 %v184
    %251 = vmatprep.subr.bf16.mxu0 0
    %252 = vmatpush1.bf16.msra.mxu0 0
    %253 = vmatprep.subr.bf16.mxu0 0
    %254 = vmatpush1.bf16.msra.mxu0 0
    %255 = vmatprep.subr.bf16.mxu0 0
    %256 = vmatpush1.bf16.msra.mxu0 0
    %257 = vmatprep.subr.bf16.mxu0 0
    %258 = vmatpush1.bf16.msra.mxu0 0
    %259 = vmatprep.subr.bf16.mxu0 0
    %260 = vmatpush1.bf16.msra.mxu0 0
    %261 = vmatprep.subr.bf16.mxu0 0
    %262 = vmatpush1.bf16.msra.mxu0 0
    %263 = vmatprep.subr.bf16.mxu0 0
    %264 = vmatpush1.bf16.msra.mxu0 0
    %265 = vmatprep.subr.bf16.mxu0 0
    %266 = vmatpush1.bf16.msra.mxu0 0
    %267 = vmatprep.mubr.bf16.mxu0 0
    %268 = vmatmul.mubr.bf16.gmra.mrb[0].mxu0 %v234
    %v269 = vpop.f32.mrb[0].mxu0
    %v270 = vadd.f32 %v143, %v269
    %v271 = vpop.f32.mrb[0].mxu0
    %v272 = vpop.f32.mrb[0].mxu0
    %v273 = vpop.f32.mrb[0].mxu0
    %274 = vdwg.mxu0
    %v275 = vmul.f32 %v228, %v270
    %276 = vadd.xlane.f32.xlu0 %v275
    %v277 = vpop.xlane.xlu0 %276
    %vm278 = vcmask 7168
    %279 = vst.msk [vmem:[%s117] sm:$0xff] %vm278, %v277
    %v280 = vld [vmem:[%s105] sm:$0xff]
    %v281 = vsub.f32 %v280, %v277
    %v282 = vmax.f32 %v281, 0.0
    %v283 = vld [vmem:[%s111] sm:$0xff]
    %v284 = vsub.f32 %v277, %v283
    %v285 = vmax.f32 %v284, 0.0
    %v286 = vmul.f32 %v282, %v282
    %v287 = vmul.f32 %v285, %v285
    %v288 = vadd.f32 %v286, %v287
    %v289 = vsel %vm278, %v288, 0.0
    %290 = vadd.xlane.f32.xlu0 %v289
    %v291 = vpop.xlane.xlu0 %290
    %v292 = vrot.slane %v291, 4
    %v293 = vadd.f32 %v291, %v292
    %v294 = vrot.slane %v293, 2
    %v295 = vadd.f32 %v293, %v294
    %v296 = vrot.slane %v295, 1
    %v297 = vadd.f32 %v295, %v296
    %s298 = vtos %v297
    %v299 = vstv %s298
    %v300 = vmul.f32 %v299, 0.125
    %p301 = scmp.eq.s32.totalorder 0, 0
    // Predicated region
    $region30: #{tpu_custom_call.1} parent=1 // pred_check
      %p302 = pneg %p301
    $region31: #{tpu_custom_call.1} parent=1 // pred_check_branch
      %304 = sbr.rel (%p302) target = $region33
    $region32: #{tpu_custom_call.1} parent=1 // pred_region
      %vm305 = vcmask 0
      %306 = vst.msk [vmem:[#allocation5] sm:$0x1] %vm305, 0.0
    $region33: #{tpu_custom_call.1} parent=1 // pred_fallthru
      _
    %v307 = vld [vmem:[#allocation5] sm:$0x1]
    %v308 = vadd.f32 %v307, %v300
    %vm309 = vcmask 0
    %310 = vst.msk [vmem:[#allocation5] sm:$0x1] %vm309, %v308
    %s311 = sadd.s32 0, 0
    %p312 = scmp.lt.s32.totalorder %s311, 0
    %s313 = scalar_select %p312, %s311, 0
    %s314 = smul.addr %s313, 8
    %s315 = scalar_lea.vmem %s6, %s314
    // Predicated region
    $region34: #{tpu_custom_call.1} parent=1 // pred_check
      _
    $region35: #{tpu_custom_call.1} parent=1 // pred_check_branch
      %317 = sbr.rel (0) target = $region37
    $region36: #{tpu_custom_call.1} parent=1 // pred_region
      %s318 = sadd.s32 0, 0
    $region37: #{tpu_custom_call.1} parent=1 // pred_fallthru
      _
    // Predicated region
    $region38: #{tpu_custom_call.1} parent=1 // pred_check
      _
    $region39: #{tpu_custom_call.1} parent=1 // pred_check_branch
      %320 = sbr.rel (0) target = $region41
    $region40: #{tpu_custom_call.1} parent=1 // pred_region
      %s322 = ssub.s32 16, 16
      %323 = vsyncadd [#allocation4], %s322
      %s325 = sshll.u32 [#allocation5], 4
      %s326 = int_to_ptr.vmem [resolvable:$true] %s325
      %328 = dma.vmem_to_hbm [thread:$0]  %s326, 16, %s7, [#allocation4]
    $region41: #{tpu_custom_call.1} parent=1 // pred_fallthru
      _
    // Predicated region
    $region42: #{tpu_custom_call.1} parent=1 // pred_check
      _
    $region43: #{tpu_custom_call.1} parent=1 // pred_check_branch
      %330 = sbr.rel (0) target = $region45
    $region44: #{tpu_custom_call.1} parent=1 // pred_region
      %s331 = sadd.s32 0, 0
      %p332 = scmp.lt.s32.totalorder %s331, 0
      %s333 = scalar_select %p332, %s331, 0
      %s334 = smul.addr %s333, 8
      %s335 = scalar_lea.vmem %s6, %s334
    $region45: #{tpu_custom_call.1} parent=1 // pred_fallthru
      _
    // Predicated region
    $region46: #{tpu_custom_call.1} parent=1 // pred_check
      _
    $region47: #{tpu_custom_call.1} parent=1 // pred_check_branch
      %337 = sbr.rel (0) target = $region49
    $region48: #{tpu_custom_call.1} parent=1 // pred_region
      %338 = dma.done [#allocation4], 16
    $region49: #{tpu_custom_call.1} parent=1 // pred_fallthru
      _
    %339 = vsyncpa [#allocation3], 1
    %340 = vsyncpa [#allocation4], 1

</llo_original>
